<compile_context>
chip_gen: v7x
topology: tpu7x:2x2x1
jax: 0.10.0
libtpu: 0.0.40
codegen_flags: <defaults>
</compile_context>

<pallas_src>
import jax
import jax.numpy as jnp
import numpy as np
from jax.experimental import pallas as pl
from jax.experimental.pallas import tpu as pltpu


# ----------------------------------------------------------------------------
# Pallas kernel: the LSTM recurrence only (h/c update over a chunk of TT steps)
# ----------------------------------------------------------------------------
def _lstm_recurrence_kernel(gin_ref, whh_ref, hout_ref, h_scr, c_scr):
    """Run TT LSTM steps for one batch block.

    gin_ref : (BB, TT, 4H) f32   pre-activations  x_t @ W_ih^T + b_ih + b_hh
    whh_ref : (H, 4H)      bf16  recurrent weight (pre-transposed)
    hout_ref: (BB, TT, H)  f32   hidden states for this chunk
    h_scr   : (BB, H)      f32   recurrent hidden state (persists across chunks)
    c_scr   : (BB, H)      f32   recurrent cell state   (persists across chunks)
    """
    t_chunk = pl.program_id(1)

    @pl.when(t_chunk == 0)
    def _():
        h_scr[...] = jnp.zeros_like(h_scr)
        c_scr[...] = jnp.zeros_like(c_scr)

    H = h_scr.shape[-1]
    TT = gin_ref.shape[1]

    whh = whh_ref[...]          # (H, 4H) bf16, hoisted out of the step loop
    gin = gin_ref[...]          # (BB, TT, 4H) f32, single dense load

    h = h_scr[...]              # (BB, H) f32
    c = c_scr[...]              # (BB, H) f32

    # Static unroll over the time chunk (TT is small; indices stay static).
    for s in range(TT):
        rec = jnp.dot(h.astype(whh.dtype), whh,
                      preferred_element_type=jnp.float32)     # (BB, 4H) f32
        g = gin[:, s, :] + rec                                # (BB, 4H)

        # PyTorch LSTMCell gate order: i, f, g, o
        i_g = jax.nn.sigmoid(g[:, 0 * H:1 * H])
        f_g = jax.nn.sigmoid(g[:, 1 * H:2 * H])
        g_g = jnp.tanh(g[:, 2 * H:3 * H])
        o_g = jax.nn.sigmoid(g[:, 3 * H:4 * H])

        c = f_g * c + i_g * g_g
        h = o_g * jnp.tanh(c)
        hout_ref[:, s, :] = h.astype(hout_ref.dtype)

    h_scr[...] = h
    c_scr[...] = c


# ----------------------------------------------------------------------------
# Wrapper
# ----------------------------------------------------------------------------
def _pick_time_block(T, cap=32):
    """Largest time block TT with TT | T and (TT % 8 == 0 or TT == T)."""
    if T <= cap:
        return T
    for tt in range(cap, 7, -1):
        if T % tt == 0 and tt % 8 == 0:
            return tt
    return T  # fall back: whole sequence in one block (full-extent is legal)


def prepare_params(params):
    """One-time layout prep: transposes, bf16 casts, bias fold (keep out of
    the per-call path)."""
    return {
        "embed_x": params["embed_x"].astype(jnp.float32),
        "embed_label": params["embed_label"].astype(jnp.float32),
        "w_ih_t": params["w_ih"].T.astype(jnp.bfloat16),        # (2E, 4H)
        "w_hh_t": params["w_hh"].T.astype(jnp.bfloat16),        # (H, 4H)
        "bias": (params["b_ih"] + params["b_hh"]).astype(jnp.float32),  # (4H,)
        "fc_w_t": params["fc_w"].T.astype(jnp.bfloat16),        # (H, C)
        "fc_b": params["fc_b"].astype(jnp.float32),             # (C,)
    }


def cond_rnn_lstm_embed_forward(x, prep):
    """x: (B, T, 2) int32 indices. Returns (B, T, num_classes) float32."""
    B, T, _ = x.shape
    H = prep["w_hh_t"].shape[0]

    # ---- glue: embedding gathers + concat (data-dependent lookup, plain JAX)
    x_emb = jnp.take(prep["embed_x"], x[:, :, 0], axis=0)        # (B, T, E)
    l_emb = jnp.take(prep["embed_label"], x[:, :, 1], axis=0)    # (B, T, E)
    x_all = jnp.concatenate([x_emb, l_emb], axis=-1)             # (B, T, 2E)

    # ---- hoisted input projection: one large bf16 matmul, f32 accumulation
    gates_in = (jnp.dot(x_all.astype(jnp.bfloat16), prep["w_ih_t"],
                        preferred_element_type=jnp.float32)
                + prep["bias"])                                  # (B, T, 4H) f32

    # ---- Pallas recurrence kernel: grid (batch blocks, time chunks)
    bb = B // 2 if B % 2 == 0 else B        # 2 batch shards -> 2 TCs on v7x
    tt = _pick_time_block(T)

    h_all = pl.pallas_call(
        _lstm_recurrence_kernel,
        out_shape=jax.ShapeDtypeStruct((B, T, H), jnp.float32),
        grid_spec=pltpu.PrefetchScalarGridSpec(
            num_scalar_prefetch=0,
            grid=(B // bb, T // tt),
            in_specs=[
                pl.BlockSpec((bb, tt, 4 * H), lambda b, t: (b, t, 0)),  # gates
                pl.BlockSpec((H, 4 * H), lambda b, t: (0, 0)),          # W_hh^T
            ],
            out_specs=pl.BlockSpec((bb, tt, H), lambda b, t: (b, t, 0)),
            scratch_shapes=[
                pltpu.VMEM((bb, H), jnp.float32),   # h state
                pltpu.VMEM((bb, H), jnp.float32),   # c state
            ],
        ),
        compiler_params=pltpu.CompilerParams(
            # batch shards are independent (megacore on v7x); time is the
            # recurrence -> sequential.
            dimension_semantics=("parallel", "arbitrary"),
        ),
    )(gates_in, prep["w_hh_t"])                                  # (B, T, H)

    # ---- hoisted output FC: one large lane-dense matmul outside the loop
    logits = (jnp.dot(h_all.astype(jnp.bfloat16), prep["fc_w_t"],
                      preferred_element_type=jnp.float32)
              + prep["fc_b"])                                    # (B, T, C)
    return logits


# ----------------------------------------------------------------------------
# Pure-JAX reference (mirrors the PyTorch module, full f32)
# ----------------------------------------------------------------------------
def _reference_forward(x, params):
    H = params["w_hh"].shape[0] // 4
    x_emb = jnp.take(params["embed_x"], x[:, :, 0], axis=0)
    l_emb = jnp.take(params["embed_label"], x[:, :, 1], axis=0)
    x_all = jnp.concatenate([x_emb, l_emb], axis=-1)             # (B, T, 2E)
    B = x_all.shape[0]

    def step(carry, x_t):
        h, c = carry
        gates = (x_t @ params["w_ih"].T + params["b_ih"]
                 + h @ params["w_hh"].T + params["b_hh"])
        i = jax.nn.sigmoid(gates[:, 0 * H:1 * H])
        f = jax.nn.sigmoid(gates[:, 1 * H:2 * H])
        g = jnp.tanh(gates[:, 2 * H:3 * H])
        o = jax.nn.sigmoid(gates[:, 3 * H:4 * H])
        c_new = f * c + i * g
        h_new = o * jnp.tanh(c_new)
        return (h_new, c_new), h_new

    h0 = jnp.zeros((B, H), jnp.float32)
    c0 = jnp.zeros((B, H), jnp.float32)
    _, hs = jax.lax.scan(step, (h0, c0), jnp.transpose(x_all, (1, 0, 2)))
    outs = jnp.transpose(hs, (1, 0, 2))                          # (B, T, H)
    return outs @ params["fc_w"].T + params["fc_b"]              # (B, T, C)


def init_params(key, embed_size, hidden_size, num_labels, num_classes):
    ks = jax.random.split(key, 8)
    inp = 2 * embed_size
    stdv = 1.0 / np.sqrt(hidden_size)
    u = lambda k, shape, a: jax.random.uniform(k, shape, jnp.float32, -a, a)
    return {
        "embed_x": u(ks[0], (num_classes, embed_size), 0.1),
        "embed_label": u(ks[1], (num_labels, embed_size), 0.1),
        "w_ih": u(ks[2], (4 * hidden_size, inp), stdv),
        "w_hh": u(ks[3], (4 * hidden_size, hidden_size), stdv),
        "b_ih": u(ks[4], (4 * hidden_size,), stdv),
        "b_hh": u(ks[5], (4 * hidden_size,), stdv),
        "fc_w": u(ks[6], (num_classes, hidden_size), stdv),
        "fc_b": u(ks[7], (num_classes,), stdv),
    }


if __name__ == "__main__":
    B, T = 2, 8
    embed_size, hidden_size = 16, 32
    num_labels, num_classes = 4, 10

    key = jax.random.PRNGKey(0)
    k_p, k_x, k_l = jax.random.split(key, 3)
    params = init_params(k_p, embed_size, hidden_size, num_labels, num_classes)
    prep = prepare_params(params)

    x_idx = jax.random.randint(k_x, (B, T, 1), 0, num_classes, jnp.int32)
    l_idx = jax.random.randint(k_l, (B, T, 1), 0, num_labels, jnp.int32)
    x = jnp.concatenate([x_idx, l_idx], axis=-1)                 # (B, T, 2)

    fwd = jax.jit(cond_rnn_lstm_embed_forward)
    out = jax.block_until_ready(fwd(x, prep))

    ref = jax.block_until_ready(_reference_forward(x, params))
    # bf16 matmul operands / f32 accumulation -> loose-ish tolerance
    np.testing.assert_allclose(np.asarray(out), np.asarray(ref),
                               rtol=2e-2, atol=2e-2)
    assert out.shape == (B, T, num_classes)
    print("KERNEL_OK")
</pallas_src>

<mosaic_0001>
module attributes {stable_mosaic.version = 11 : i64} {
  func.func @_lstm_recurrence_kernel(%arg0: i32, %arg1: i32, %arg2: memref<1x8x128xf32, #tpu.memory_space<vmem>>, %arg3: memref<32x128xbf16, #tpu.memory_space<vmem>>, %arg4: memref<1x8x32xf32, #tpu.memory_space<vmem>>, %arg5: memref<1x32xf32, #tpu.memory_space<vmem>>, %arg6: memref<1x32xf32, #tpu.memory_space<vmem>>) attributes {dimension_semantics = [#tpu.dimension_semantics<parallel>, #tpu.dimension_semantics<arbitrary>], iteration_bounds = array<i64: 2, 1>, scalar_prefetch = 0 : i64, scratch_operands = 2 : i64, tpu.core_type = #tpu.core_type<tc>, window_params = [{transform_indices = @transform_0, window_bounds = array<i64: 1, 8, 128>}, {pipeline_mode = #tpu.pipeline_mode<synchronous>, transform_indices = @transform_1, window_bounds = array<i64: 32, 128>}, {transform_indices = @transform_2, window_bounds = array<i64: 1, 8, 32>}]} {
    %c0_i32 = arith.constant 0 : i32
    %0 = arith.cmpi eq, %arg1, %c0_i32 : i32
    %1 = arith.extui %0 : i1 to i32
    %c0_i32_0 = arith.constant 0 : i32
    %2 = arith.cmpi ne, %1, %c0_i32_0 : i32
    scf.if %2 {
      %cst_61 = arith.constant 0.000000e+00 : f32
      %273 = vector.broadcast %cst_61 : f32 to vector<1x32xf32>
      %c0_62 = arith.constant 0 : index
      %c0_63 = arith.constant 0 : index
      %274 = vector.load %arg5[%c0_62, %c0_63] : memref<1x32xf32, #tpu.memory_space<vmem>>, vector<1x32xf32>
      tpu.vector_store %arg5[%c0_62, %c0_63], %273 {strides = array<i32>} : memref<1x32xf32, #tpu.memory_space<vmem>>, vector<1x32xf32>,
      %cst_64 = arith.constant 0.000000e+00 : f32
      %275 = vector.broadcast %cst_64 : f32 to vector<1x32xf32>
      %c0_65 = arith.constant 0 : index
      %c0_66 = arith.constant 0 : index
      %276 = vector.load %arg6[%c0_65, %c0_66] : memref<1x32xf32, #tpu.memory_space<vmem>>, vector<1x32xf32>
      tpu.vector_store %arg6[%c0_65, %c0_66], %275 {strides = array<i32>} : memref<1x32xf32, #tpu.memory_space<vmem>>, vector<1x32xf32>,
    } else {
    }
    %c0 = arith.constant 0 : index
    %c0_1 = arith.constant 0 : index
    %3 = vector.load %arg3[%c0, %c0_1] : memref<32x128xbf16, #tpu.memory_space<vmem>>, vector<32x128xbf16>
    %c0_2 = arith.constant 0 : index
    %c0_3 = arith.constant 0 : index
    %c0_4 = arith.constant 0 : index
    %4 = vector.load %arg2[%c0_2, %c0_3, %c0_4] : memref<1x8x128xf32, #tpu.memory_space<vmem>>, vector<1x8x128xf32>
    %c0_5 = arith.constant 0 : index
    %c0_6 = arith.constant 0 : index
    %5 = vector.load %arg5[%c0_5, %c0_6] : memref<1x32xf32, #tpu.memory_space<vmem>>, vector<1x32xf32>
    %c0_7 = arith.constant 0 : index
    %c0_8 = arith.constant 0 : index
    %6 = vector.load %arg6[%c0_7, %c0_8] : memref<1x32xf32, #tpu.memory_space<vmem>>, vector<1x32xf32>
    %7 = arith.truncf %5 : vector<1x32xf32> to vector<1x32xbf16>
    %cst = arith.constant dense<0.000000e+00> : vector<1x128xf32>
    %8 = tpu.matmul %7, %3, %cst {dimension_numbers = #tpu.dot_dimension_numbers<[1], [0], [0], [1], [0, 0, 1, 1], [], []>} : vector<1x32xbf16>, vector<32x128xbf16>, vector<1x128xf32> -> vector<1x128xf32>
    %9 = vector.extract_strided_slice %4 {offsets = [0, 0, 0], sizes = [1, 1, 128], strides = [1, 1, 1]} : vector<1x8x128xf32> to vector<1x1x128xf32>
    %10 = vector.shape_cast %9 : vector<1x1x128xf32> to vector<1x128xf32>
    %11 = arith.addf %10, %8 : vector<1x128xf32>
    %12 = vector.extract_strided_slice %11 {offsets = [0, 0], sizes = [1, 32], strides = [1, 1]} : vector<1x128xf32> to vector<1x32xf32>
    %13 = arith.negf %12 : vector<1x32xf32>
    %14 = math.exp %13 : vector<1x32xf32>
    %cst_9 = arith.constant 1.000000e+00 : f32
    %15 = vector.broadcast %cst_9 : f32 to vector<1x32xf32>
    %16 = arith.addf %15, %14 : vector<1x32xf32>
    %17 = arith.divf %15, %16 : vector<1x32xf32>
    %18 = vector.extract_strided_slice %11 {offsets = [0, 32], sizes = [1, 32], strides = [1, 1]} : vector<1x128xf32> to vector<1x32xf32>
    %19 = arith.negf %18 : vector<1x32xf32>
    %20 = math.exp %19 : vector<1x32xf32>
    %cst_10 = arith.constant 1.000000e+00 : f32
    %21 = vector.broadcast %cst_10 : f32 to vector<1x32xf32>
    %22 = arith.addf %21, %20 : vector<1x32xf32>
    %23 = arith.divf %21, %22 : vector<1x32xf32>
    %24 = vector.extract_strided_slice %11 {offsets = [0, 64], sizes = [1, 32], strides = [1, 1]} : vector<1x128xf32> to vector<1x32xf32>
    %25 = math.tanh %24 : vector<1x32xf32>
    %26 = vector.extract_strided_slice %11 {offsets = [0, 96], sizes = [1, 32], strides = [1, 1]} : vector<1x128xf32> to vector<1x32xf32>
    %27 = arith.negf %26 : vector<1x32xf32>
    %28 = math.exp %27 : vector<1x32xf32>
    %cst_11 = arith.constant 1.000000e+00 : f32
    %29 = vector.broadcast %cst_11 : f32 to vector<1x32xf32>
    %30 = arith.addf %29, %28 : vector<1x32xf32>
    %31 = arith.divf %29, %30 : vector<1x32xf32>
    %32 = arith.mulf %23, %6 : vector<1x32xf32>
    %33 = arith.mulf %17, %25 : vector<1x32xf32>
    %34 = arith.addf %32, %33 : vector<1x32xf32>
    %35 = math.tanh %34 : vector<1x32xf32>
    %36 = arith.mulf %31, %35 : vector<1x32xf32>
    %c0_12 = arith.constant 0 : index
    %c0_13 = arith.constant 0 : index
    %c0_14 = arith.constant 0 : index
    %37 = vector.load %arg4[%c0_12, %c0_13, %c0_14] : memref<1x8x32xf32, #tpu.memory_space<vmem>>, vector<1x1x32xf32>
    %38 = vector.shape_cast %37 : vector<1x1x32xf32> to vector<1x32xf32>
    %39 = vector.shape_cast %36 : vector<1x32xf32> to vector<1x1x32xf32>
    tpu.vector_store %arg4[%c0_12, %c0_13, %c0_14], %39 {strides = array<i32>} : memref<1x8x32xf32, #tpu.memory_space<vmem>>, vector<1x1x32xf32>,
    %40 = arith.truncf %36 : vector<1x32xf32> to vector<1x32xbf16>
    %cst_15 = arith.constant dense<0.000000e+00> : vector<1x128xf32>
    %41 = tpu.matmul %40, %3, %cst_15 {dimension_numbers = #tpu.dot_dimension_numbers<[1], [0], [0], [1], [0, 0, 1, 1], [], []>} : vector<1x32xbf16>, vector<32x128xbf16>, vector<1x128xf32> -> vector<1x128xf32>
    %42 = vector.extract_strided_slice %4 {offsets = [0, 1, 0], sizes = [1, 1, 128], strides = [1, 1, 1]} : vector<1x8x128xf32> to vector<1x1x128xf32>
    %43 = vector.shape_cast %42 : vector<1x1x128xf32> to vector<1x128xf32>
    %44 = arith.addf %43, %41 : vector<1x128xf32>
    %45 = vector.extract_strided_slice %44 {offsets = [0, 0], sizes = [1, 32], strides = [1, 1]} : vector<1x128xf32> to vector<1x32xf32>
    %46 = arith.negf %45 : vector<1x32xf32>
    %47 = math.exp %46 : vector<1x32xf32>
    %cst_16 = arith.constant 1.000000e+00 : f32
    %48 = vector.broadcast %cst_16 : f32 to vector<1x32xf32>
    %49 = arith.addf %48, %47 : vector<1x32xf32>
    %50 = arith.divf %48, %49 : vector<1x32xf32>
    %51 = vector.extract_strided_slice %44 {offsets = [0, 32], sizes = [1, 32], strides = [1, 1]} : vector<1x128xf32> to vector<1x32xf32>
    %52 = arith.negf %51 : vector<1x32xf32>
    %53 = math.exp %52 : vector<1x32xf32>
    %cst_17 = arith.constant 1.000000e+00 : f32
    %54 = vector.broadcast %cst_17 : f32 to vector<1x32xf32>
    %55 = arith.addf %54, %53 : vector<1x32xf32>
    %56 = arith.divf %54, %55 : vector<1x32xf32>
    %57 = vector.extract_strided_slice %44 {offsets = [0, 64], sizes = [1, 32], strides = [1, 1]} : vector<1x128xf32> to vector<1x32xf32>
    %58 = math.tanh %57 : vector<1x32xf32>
    %59 = vector.extract_strided_slice %44 {offsets = [0, 96], sizes = [1, 32], strides = [1, 1]} : vector<1x128xf32> to vector<1x32xf32>
    %60 = arith.negf %59 : vector<1x32xf32>
    %61 = math.exp %60 : vector<1x32xf32>
    %cst_18 = arith.constant 1.000000e+00 : f32
    %62 = vector.broadcast %cst_18 : f32 to vector<1x32xf32>
    %63 = arith.addf %62, %61 : vector<1x32xf32>
    %64 = arith.divf %62, %63 : vector<1x32xf32>
    %65 = arith.mulf %56, %34 : vector<1x32xf32>
    %66 = arith.mulf %50, %58 : vector<1x32xf32>
    %67 = arith.addf %65, %66 : vector<1x32xf32>
    %68 = math.tanh %67 : vector<1x32xf32>
    %69 = arith.mulf %64, %68 : vector<1x32xf32>
    %c0_19 = arith.constant 0 : index
    %c1 = arith.constant 1 : index
    %c0_20 = arith.constant 0 : index
    %70 = vector.load %arg4[%c0_19, %c1, %c0_20] : memref<1x8x32xf32, #tpu.memory_space<vmem>>, vector<1x1x32xf32>
    %71 = vector.shape_cast %70 : vector<1x1x32xf32> to vector<1x32xf32>
    %72 = vector.shape_cast %69 : vector<1x32xf32> to vector<1x1x32xf32>
    tpu.vector_store %arg4[%c0_19, %c1, %c0_20], %72 {strides = array<i32>} : memref<1x8x32xf32, #tpu.memory_space<vmem>>, vector<1x1x32xf32>,
    %73 = arith.truncf %69 : vector<1x32xf32> to vector<1x32xbf16>
    %cst_21 = arith.constant dense<0.000000e+00> : vector<1x128xf32>
    %74 = tpu.matmul %73, %3, %cst_21 {dimension_numbers = #tpu.dot_dimension_numbers<[1], [0], [0], [1], [0, 0, 1, 1], [], []>} : vector<1x32xbf16>, vector<32x128xbf16>, vector<1x128xf32> -> vector<1x128xf32>
    %75 = vector.extract_strided_slice %4 {offsets = [0, 2, 0], sizes = [1, 1, 128], strides = [1, 1, 1]} : vector<1x8x128xf32> to vector<1x1x128xf32>
    %76 = vector.shape_cast %75 : vector<1x1x128xf32> to vector<1x128xf32>
    %77 = arith.addf %76, %74 : vector<1x128xf32>
    %78 = vector.extract_strided_slice %77 {offsets = [0, 0], sizes = [1, 32], strides = [1, 1]} : vector<1x128xf32> to vector<1x32xf32>
    %79 = arith.negf %78 : vector<1x32xf32>
    %80 = math.exp %79 : vector<1x32xf32>
    %cst_22 = arith.constant 1.000000e+00 : f32
    %81 = vector.broadcast %cst_22 : f32 to vector<1x32xf32>
    %82 = arith.addf %81, %80 : vector<1x32xf32>
    %83 = arith.divf %81, %82 : vector<1x32xf32>
    %84 = vector.extract_strided_slice %77 {offsets = [0, 32], sizes = [1, 32], strides = [1, 1]} : vector<1x128xf32> to vector<1x32xf32>
    %85 = arith.negf %84 : vector<1x32xf32>
    %86 = math.exp %85 : vector<1x32xf32>
    %cst_23 = arith.constant 1.000000e+00 : f32
    %87 = vector.broadcast %cst_23 : f32 to vector<1x32xf32>
    %88 = arith.addf %87, %86 : vector<1x32xf32>
    %89 = arith.divf %87, %88 : vector<1x32xf32>
    %90 = vector.extract_strided_slice %77 {offsets = [0, 64], sizes = [1, 32], strides = [1, 1]} : vector<1x128xf32> to vector<1x32xf32>
    %91 = math.tanh %90 : vector<1x32xf32>
    %92 = vector.extract_strided_slice %77 {offsets = [0, 96], sizes = [1, 32], strides = [1, 1]} : vector<1x128xf32> to vector<1x32xf32>
    %93 = arith.negf %92 : vector<1x32xf32>
    %94 = math.exp %93 : vector<1x32xf32>
    %cst_24 = arith.constant 1.000000e+00 : f32
    %95 = vector.broadcast %cst_24 : f32 to vector<1x32xf32>
    %96 = arith.addf %95, %94 : vector<1x32xf32>
    %97 = arith.divf %95, %96 : vector<1x32xf32>
    %98 = arith.mulf %89, %67 : vector<1x32xf32>
    %99 = arith.mulf %83, %91 : vector<1x32xf32>
    %100 = arith.addf %98, %99 : vector<1x32xf32>
    %101 = math.tanh %100 : vector<1x32xf32>
    %102 = arith.mulf %97, %101 : vector<1x32xf32>
    %c0_25 = arith.constant 0 : index
    %c2 = arith.constant 2 : index
    %c0_26 = arith.constant 0 : index
    %103 = vector.load %arg4[%c0_25, %c2, %c0_26] : memref<1x8x32xf32, #tpu.memory_space<vmem>>, vector<1x1x32xf32>
    %104 = vector.shape_cast %103 : vector<1x1x32xf32> to vector<1x32xf32>
    %105 = vector.shape_cast %102 : vector<1x32xf32> to vector<1x1x32xf32>
    tpu.vector_store %arg4[%c0_25, %c2, %c0_26], %105 {strides = array<i32>} : memref<1x8x32xf32, #tpu.memory_space<vmem>>, vector<1x1x32xf32>,
    %106 = arith.truncf %102 : vector<1x32xf32> to vector<1x32xbf16>
    %cst_27 = arith.constant dense<0.000000e+00> : vector<1x128xf32>
    %107 = tpu.matmul %106, %3, %cst_27 {dimension_numbers = #tpu.dot_dimension_numbers<[1], [0], [0], [1], [0, 0, 1, 1], [], []>} : vector<1x32xbf16>, vector<32x128xbf16>, vector<1x128xf32> -> vector<1x128xf32>
    %108 = vector.extract_strided_slice %4 {offsets = [0, 3, 0], sizes = [1, 1, 128], strides = [1, 1, 1]} : vector<1x8x128xf32> to vector<1x1x128xf32>
    %109 = vector.shape_cast %108 : vector<1x1x128xf32> to vector<1x128xf32>
    %110 = arith.addf %109, %107 : vector<1x128xf32>
    %111 = vector.extract_strided_slice %110 {offsets = [0, 0], sizes = [1, 32], strides = [1, 1]} : vector<1x128xf32> to vector<1x32xf32>
    %112 = arith.negf %111 : vector<1x32xf32>
    %113 = math.exp %112 : vector<1x32xf32>
    %cst_28 = arith.constant 1.000000e+00 : f32
    %114 = vector.broadcast %cst_28 : f32 to vector<1x32xf32>
    %115 = arith.addf %114, %113 : vector<1x32xf32>
    %116 = arith.divf %114, %115 : vector<1x32xf32>
    %117 = vector.extract_strided_slice %110 {offsets = [0, 32], sizes = [1, 32], strides = [1, 1]} : vector<1x128xf32> to vector<1x32xf32>
    %118 = arith.negf %117 : vector<1x32xf32>
    %119 = math.exp %118 : vector<1x32xf32>
    %cst_29 = arith.constant 1.000000e+00 : f32
    %120 = vector.broadcast %cst_29 : f32 to vector<1x32xf32>
    %121 = arith.addf %120, %119 : vector<1x32xf32>
    %122 = arith.divf %120, %121 : vector<1x32xf32>
    %123 = vector.extract_strided_slice %110 {offsets = [0, 64], sizes = [1, 32], strides = [1, 1]} : vector<1x128xf32> to vector<1x32xf32>
    %124 = math.tanh %123 : vector<1x32xf32>
    %125 = vector.extract_strided_slice %110 {offsets = [0, 96], sizes = [1, 32], strides = [1, 1]} : vector<1x128xf32> to vector<1x32xf32>
    %126 = arith.negf %125 : vector<1x32xf32>
    %127 = math.exp %126 : vector<1x32xf32>
    %cst_30 = arith.constant 1.000000e+00 : f32
    %128 = vector.broadcast %cst_30 : f32 to vector<1x32xf32>
    %129 = arith.addf %128, %127 : vector<1x32xf32>
    %130 = arith.divf %128, %129 : vector<1x32xf32>
    %131 = arith.mulf %122, %100 : vector<1x32xf32>
    %132 = arith.mulf %116, %124 : vector<1x32xf32>
    %133 = arith.addf %131, %132 : vector<1x32xf32>
    %134 = math.tanh %133 : vector<1x32xf32>
    %135 = arith.mulf %130, %134 : vector<1x32xf32>
    %c0_31 = arith.constant 0 : index
    %c3 = arith.constant 3 : index
    %c0_32 = arith.constant 0 : index
    %136 = vector.load %arg4[%c0_31, %c3, %c0_32] : memref<1x8x32xf32, #tpu.memory_space<vmem>>, vector<1x1x32xf32>
    %137 = vector.shape_cast %136 : vector<1x1x32xf32> to vector<1x32xf32>
    %138 = vector.shape_cast %135 : vector<1x32xf32> to vector<1x1x32xf32>
    tpu.vector_store %arg4[%c0_31, %c3, %c0_32], %138 {strides = array<i32>} : memref<1x8x32xf32, #tpu.memory_space<vmem>>, vector<1x1x32xf32>,
    %139 = arith.truncf %135 : vector<1x32xf32> to vector<1x32xbf16>
    %cst_33 = arith.constant dense<0.000000e+00> : vector<1x128xf32>
    %140 = tpu.matmul %139, %3, %cst_33 {dimension_numbers = #tpu.dot_dimension_numbers<[1], [0], [0], [1], [0, 0, 1, 1], [], []>} : vector<1x32xbf16>, vector<32x128xbf16>, vector<1x128xf32> -> vector<1x128xf32>
    %141 = vector.extract_strided_slice %4 {offsets = [0, 4, 0], sizes = [1, 1, 128], strides = [1, 1, 1]} : vector<1x8x128xf32> to vector<1x1x128xf32>
    %142 = vector.shape_cast %141 : vector<1x1x128xf32> to vector<1x128xf32>
    %143 = arith.addf %142, %140 : vector<1x128xf32>
    %144 = vector.extract_strided_slice %143 {offsets = [0, 0], sizes = [1, 32], strides = [1, 1]} : vector<1x128xf32> to vector<1x32xf32>
    %145 = arith.negf %144 : vector<1x32xf32>
    %146 = math.exp %145 : vector<1x32xf32>
    %cst_34 = arith.constant 1.000000e+00 : f32
    %147 = vector.broadcast %cst_34 : f32 to vector<1x32xf32>
    %148 = arith.addf %147, %146 : vector<1x32xf32>
    %149 = arith.divf %147, %148 : vector<1x32xf32>
    %150 = vector.extract_strided_slice %143 {offsets = [0, 32], sizes = [1, 32], strides = [1, 1]} : vector<1x128xf32> to vector<1x32xf32>
    %151 = arith.negf %150 : vector<1x32xf32>
    %152 = math.exp %151 : vector<1x32xf32>
    %cst_35 = arith.constant 1.000000e+00 : f32
    %153 = vector.broadcast %cst_35 : f32 to vector<1x32xf32>
    %154 = arith.addf %153, %152 : vector<1x32xf32>
    %155 = arith.divf %153, %154 : vector<1x32xf32>
    %156 = vector.extract_strided_slice %143 {offsets = [0, 64], sizes = [1, 32], strides = [1, 1]} : vector<1x128xf32> to vector<1x32xf32>
    %157 = math.tanh %156 : vector<1x32xf32>
    %158 = vector.extract_strided_slice %143 {offsets = [0, 96], sizes = [1, 32], strides = [1, 1]} : vector<1x128xf32> to vector<1x32xf32>
    %159 = arith.negf %158 : vector<1x32xf32>
    %160 = math.exp %159 : vector<1x32xf32>
    %cst_36 = arith.constant 1.000000e+00 : f32
    %161 = vector.broadcast %cst_36 : f32 to vector<1x32xf32>
    %162 = arith.addf %161, %160 : vector<1x32xf32>
    %163 = arith.divf %161, %162 : vector<1x32xf32>
    %164 = arith.mulf %155, %133 : vector<1x32xf32>
    %165 = arith.mulf %149, %157 : vector<1x32xf32>
    %166 = arith.addf %164, %165 : vector<1x32xf32>
    %167 = math.tanh %166 : vector<1x32xf32>
    %168 = arith.mulf %163, %167 : vector<1x32xf32>
    %c0_37 = arith.constant 0 : index
    %c4 = arith.constant 4 : index
    %c0_38 = arith.constant 0 : index
    %169 = vector.load %arg4[%c0_37, %c4, %c0_38] : memref<1x8x32xf32, #tpu.memory_space<vmem>>, vector<1x1x32xf32>
    %170 = vector.shape_cast %169 : vector<1x1x32xf32> to vector<1x32xf32>
    %171 = vector.shape_cast %168 : vector<1x32xf32> to vector<1x1x32xf32>
    tpu.vector_store %arg4[%c0_37, %c4, %c0_38], %171 {strides = array<i32>} : memref<1x8x32xf32, #tpu.memory_space<vmem>>, vector<1x1x32xf32>,
    %172 = arith.truncf %168 : vector<1x32xf32> to vector<1x32xbf16>
    %cst_39 = arith.constant dense<0.000000e+00> : vector<1x128xf32>
    %173 = tpu.matmul %172, %3, %cst_39 {dimension_numbers = #tpu.dot_dimension_numbers<[1], [0], [0], [1], [0, 0, 1, 1], [], []>} : vector<1x32xbf16>, vector<32x128xbf16>, vector<1x128xf32> -> vector<1x128xf32>
    %174 = vector.extract_strided_slice %4 {offsets = [0, 5, 0], sizes = [1, 1, 128], strides = [1, 1, 1]} : vector<1x8x128xf32> to vector<1x1x128xf32>
    %175 = vector.shape_cast %174 : vector<1x1x128xf32> to vector<1x128xf32>
    %176 = arith.addf %175, %173 : vector<1x128xf32>
    %177 = vector.extract_strided_slice %176 {offsets = [0, 0], sizes = [1, 32], strides = [1, 1]} : vector<1x128xf32> to vector<1x32xf32>
    %178 = arith.negf %177 : vector<1x32xf32>
    %179 = math.exp %178 : vector<1x32xf32>
    %cst_40 = arith.constant 1.000000e+00 : f32
    %180 = vector.broadcast %cst_40 : f32 to vector<1x32xf32>
    %181 = arith.addf %180, %179 : vector<1x32xf32>
    %182 = arith.divf %180, %181 : vector<1x32xf32>
    %183 = vector.extract_strided_slice %176 {offsets = [0, 32], sizes = [1, 32], strides = [1, 1]} : vector<1x128xf32> to vector<1x32xf32>
    %184 = arith.negf %183 : vector<1x32xf32>
    %185 = math.exp %184 : vector<1x32xf32>
    %cst_41 = arith.constant 1.000000e+00 : f32
    %186 = vector.broadcast %cst_41 : f32 to vector<1x32xf32>
    %187 = arith.addf %186, %185 : vector<1x32xf32>
    %188 = arith.divf %186, %187 : vector<1x32xf32>
    %189 = vector.extract_strided_slice %176 {offsets = [0, 64], sizes = [1, 32], strides = [1, 1]} : vector<1x128xf32> to vector<1x32xf32>
    %190 = math.tanh %189 : vector<1x32xf32>
    %191 = vector.extract_strided_slice %176 {offsets = [0, 96], sizes = [1, 32], strides = [1, 1]} : vector<1x128xf32> to vector<1x32xf32>
    %192 = arith.negf %191 : vector<1x32xf32>
    %193 = math.exp %192 : vector<1x32xf32>
    %cst_42 = arith.constant 1.000000e+00 : f32
    %194 = vector.broadcast %cst_42 : f32 to vector<1x32xf32>
    %195 = arith.addf %194, %193 : vector<1x32xf32>
    %196 = arith.divf %194, %195 : vector<1x32xf32>
    %197 = arith.mulf %188, %166 : vector<1x32xf32>
    %198 = arith.mulf %182, %190 : vector<1x32xf32>
    %199 = arith.addf %197, %198 : vector<1x32xf32>
    %200 = math.tanh %199 : vector<1x32xf32>
    %201 = arith.mulf %196, %200 : vector<1x32xf32>
    %c0_43 = arith.constant 0 : index
    %c5 = arith.constant 5 : index
    %c0_44 = arith.constant 0 : index
    %202 = vector.load %arg4[%c0_43, %c5, %c0_44] : memref<1x8x32xf32, #tpu.memory_space<vmem>>, vector<1x1x32xf32>
    %203 = vector.shape_cast %202 : vector<1x1x32xf32> to vector<1x32xf32>
    %204 = vector.shape_cast %201 : vector<1x32xf32> to vector<1x1x32xf32>
    tpu.vector_store %arg4[%c0_43, %c5, %c0_44], %204 {strides = array<i32>} : memref<1x8x32xf32, #tpu.memory_space<vmem>>, vector<1x1x32xf32>,
    %205 = arith.truncf %201 : vector<1x32xf32> to vector<1x32xbf16>
    %cst_45 = arith.constant dense<0.000000e+00> : vector<1x128xf32>
    %206 = tpu.matmul %205, %3, %cst_45 {dimension_numbers = #tpu.dot_dimension_numbers<[1], [0], [0], [1], [0, 0, 1, 1], [], []>} : vector<1x32xbf16>, vector<32x128xbf16>, vector<1x128xf32> -> vector<1x128xf32>
    %207 = vector.extract_strided_slice %4 {offsets = [0, 6, 0], sizes = [1, 1, 128], strides = [1, 1, 1]} : vector<1x8x128xf32> to vector<1x1x128xf32>
    %208 = vector.shape_cast %207 : vector<1x1x128xf32> to vector<1x128xf32>
    %209 = arith.addf %208, %206 : vector<1x128xf32>
    %210 = vector.extract_strided_slice %209 {offsets = [0, 0], sizes = [1, 32], strides = [1, 1]} : vector<1x128xf32> to vector<1x32xf32>
    %211 = arith.negf %210 : vector<1x32xf32>
    %212 = math.exp %211 : vector<1x32xf32>
    %cst_46 = arith.constant 1.000000e+00 : f32
    %213 = vector.broadcast %cst_46 : f32 to vector<1x32xf32>
    %214 = arith.addf %213, %212 : vector<1x32xf32>
    %215 = arith.divf %213, %214 : vector<1x32xf32>
    %216 = vector.extract_strided_slice %209 {offsets = [0, 32], sizes = [1, 32], strides = [1, 1]} : vector<1x128xf32> to vector<1x32xf32>
    %217 = arith.negf %216 : vector<1x32xf32>
    %218 = math.exp %217 : vector<1x32xf32>
    %cst_47 = arith.constant 1.000000e+00 : f32
    %219 = vector.broadcast %cst_47 : f32 to vector<1x32xf32>
    %220 = arith.addf %219, %218 : vector<1x32xf32>
    %221 = arith.divf %219, %220 : vector<1x32xf32>
    %222 = vector.extract_strided_slice %209 {offsets = [0, 64], sizes = [1, 32], strides = [1, 1]} : vector<1x128xf32> to vector<1x32xf32>
    %223 = math.tanh %222 : vector<1x32xf32>
    %224 = vector.extract_strided_slice %209 {offsets = [0, 96], sizes = [1, 32], strides = [1, 1]} : vector<1x128xf32> to vector<1x32xf32>
    %225 = arith.negf %224 : vector<1x32xf32>
    %226 = math.exp %225 : vector<1x32xf32>
    %cst_48 = arith.constant 1.000000e+00 : f32
    %227 = vector.broadcast %cst_48 : f32 to vector<1x32xf32>
    %228 = arith.addf %227, %226 : vector<1x32xf32>
    %229 = arith.divf %227, %228 : vector<1x32xf32>
    %230 = arith.mulf %221, %199 : vector<1x32xf32>
    %231 = arith.mulf %215, %223 : vector<1x32xf32>
    %232 = arith.addf %230, %231 : vector<1x32xf32>
    %233 = math.tanh %232 : vector<1x32xf32>
    %234 = arith.mulf %229, %233 : vector<1x32xf32>
    %c0_49 = arith.constant 0 : index
    %c6 = arith.constant 6 : index
    %c0_50 = arith.constant 0 : index
    %235 = vector.load %arg4[%c0_49, %c6, %c0_50] : memref<1x8x32xf32, #tpu.memory_space<vmem>>, vector<1x1x32xf32>
    %236 = vector.shape_cast %235 : vector<1x1x32xf32> to vector<1x32xf32>
    %237 = vector.shape_cast %234 : vector<1x32xf32> to vector<1x1x32xf32>
    tpu.vector_store %arg4[%c0_49, %c6, %c0_50], %237 {strides = array<i32>} : memref<1x8x32xf32, #tpu.memory_space<vmem>>, vector<1x1x32xf32>,
    %238 = arith.truncf %234 : vector<1x32xf32> to vector<1x32xbf16>
    %cst_51 = arith.constant dense<0.000000e+00> : vector<1x128xf32>
    %239 = tpu.matmul %238, %3, %cst_51 {dimension_numbers = #tpu.dot_dimension_numbers<[1], [0], [0], [1], [0, 0, 1, 1], [], []>} : vector<1x32xbf16>, vector<32x128xbf16>, vector<1x128xf32> -> vector<1x128xf32>
    %240 = vector.extract_strided_slice %4 {offsets = [0, 7, 0], sizes = [1, 1, 128], strides = [1, 1, 1]} : vector<1x8x128xf32> to vector<1x1x128xf32>
    %241 = vector.shape_cast %240 : vector<1x1x128xf32> to vector<1x128xf32>
    %242 = arith.addf %241, %239 : vector<1x128xf32>
    %243 = vector.extract_strided_slice %242 {offsets = [0, 0], sizes = [1, 32], strides = [1, 1]} : vector<1x128xf32> to vector<1x32xf32>
    %244 = arith.negf %243 : vector<1x32xf32>
    %245 = math.exp %244 : vector<1x32xf32>
    %cst_52 = arith.constant 1.000000e+00 : f32
    %246 = vector.broadcast %cst_52 : f32 to vector<1x32xf32>
    %247 = arith.addf %246, %245 : vector<1x32xf32>
    %248 = arith.divf %246, %247 : vector<1x32xf32>
    %249 = vector.extract_strided_slice %242 {offsets = [0, 32], sizes = [1, 32], strides = [1, 1]} : vector<1x128xf32> to vector<1x32xf32>
    %250 = arith.negf %249 : vector<1x32xf32>
    %251 = math.exp %250 : vector<1x32xf32>
    %cst_53 = arith.constant 1.000000e+00 : f32
    %252 = vector.broadcast %cst_53 : f32 to vector<1x32xf32>
    %253 = arith.addf %252, %251 : vector<1x32xf32>
    %254 = arith.divf %252, %253 : vector<1x32xf32>
    %255 = vector.extract_strided_slice %242 {offsets = [0, 64], sizes = [1, 32], strides = [1, 1]} : vector<1x128xf32> to vector<1x32xf32>
    %256 = math.tanh %255 : vector<1x32xf32>
    %257 = vector.extract_strided_slice %242 {offsets = [0, 96], sizes = [1, 32], strides = [1, 1]} : vector<1x128xf32> to vector<1x32xf32>
    %258 = arith.negf %257 : vector<1x32xf32>
    %259 = math.exp %258 : vector<1x32xf32>
    %cst_54 = arith.constant 1.000000e+00 : f32
    %260 = vector.broadcast %cst_54 : f32 to vector<1x32xf32>
    %261 = arith.addf %260, %259 : vector<1x32xf32>
    %262 = arith.divf %260, %261 : vector<1x32xf32>
    %263 = arith.mulf %254, %232 : vector<1x32xf32>
    %264 = arith.mulf %248, %256 : vector<1x32xf32>
    %265 = arith.addf %263, %264 : vector<1x32xf32>
    %266 = math.tanh %265 : vector<1x32xf32>
    %267 = arith.mulf %262, %266 : vector<1x32xf32>
    %c0_55 = arith.constant 0 : index
    %c7 = arith.constant 7 : index
    %c0_56 = arith.constant 0 : index
    %268 = vector.load %arg4[%c0_55, %c7, %c0_56] : memref<1x8x32xf32, #tpu.memory_space<vmem>>, vector<1x1x32xf32>
    %269 = vector.shape_cast %268 : vector<1x1x32xf32> to vector<1x32xf32>
    %270 = vector.shape_cast %267 : vector<1x32xf32> to vector<1x1x32xf32>
    tpu.vector_store %arg4[%c0_55, %c7, %c0_56], %270 {strides = array<i32>} : memref<1x8x32xf32, #tpu.memory_space<vmem>>, vector<1x1x32xf32>,
    %c0_57 = arith.constant 0 : index
    %c0_58 = arith.constant 0 : index
    %271 = vector.load %arg5[%c0_57, %c0_58] : memref<1x32xf32, #tpu.memory_space<vmem>>, vector<1x32xf32>
    tpu.vector_store %arg5[%c0_57, %c0_58], %267 {strides = array<i32>} : memref<1x32xf32, #tpu.memory_space<vmem>>, vector<1x32xf32>,
    %c0_59 = arith.constant 0 : index
    %c0_60 = arith.constant 0 : index
    %272 = vector.load %arg6[%c0_59, %c0_60] : memref<1x32xf32, #tpu.memory_space<vmem>>, vector<1x32xf32>
    tpu.vector_store %arg6[%c0_59, %c0_60], %265 {strides = array<i32>} : memref<1x32xf32, #tpu.memory_space<vmem>>, vector<1x32xf32>,
    return
  }
  func.func @transform_0(%arg0: i32, %arg1: i32) -> (i32, i32, i32) {
    %c0_i32 = arith.constant 0 : i32
    %c0_i32_0 = arith.constant 0 : i32
    return %arg0, %arg1, %c0_i32 : i32, i32, i32
  }
  func.func @transform_1(%arg0: i32, %arg1: i32) -> (i32, i32) {
    %c0_i32 = arith.constant 0 : i32
    %c0_i32_0 = arith.constant 0 : i32
    %c0_i32_1 = arith.constant 0 : i32
    return %c0_i32, %c0_i32_0 : i32, i32
  }
  func.func @transform_2(%arg0: i32, %arg1: i32) -> (i32, i32, i32) {
    %c0_i32 = arith.constant 0 : i32
    %c0_i32_0 = arith.constant 0 : i32
    return %arg0, %arg1, %c0_i32 : i32, i32, i32
  }
}

</mosaic_0001>

<llo_original>
// kernel: cond_rnn_lstm_embed_forward.1
$region0: #{cond_rnn_lstm_embed_forward.1}
  #allocation0 [shape = 'u32[]', space=smem, size = 0x4, offset = 0x4, fixed_abs, tag = 'smem constant byte address 0x4 - core index']
  #allocation1 [shape = 'u32[144,128]{1,0:T(1,128)}', space=vmem, size = 0x12000, scoped, tag = 'internal scratch']
  #allocation2 [shape = 'f32[1,32]{1,0:T(1,128)}', space=vmem, size = 0x200, scoped, tag = 'scratch operand']
  #allocation3 [shape = 'f32[1,32]{1,0:T(1,128)}', space=vmem, size = 0x200, scoped, tag = 'scratch operand']
  %s0 = inlined_call_operand.vmem [shape: f32[2,8,128], index: 0, kind: input, shape index: {}]
  %s1 = inlined_call_operand.vmem [shape: bf16[32,128], index: 1, kind: input, shape index: {}]
  %s2 = inlined_call_operand.vmem [shape: f32[2,8,32], index: 2, kind: output, shape index: {}]
  %s3 = sld [smem:[#allocation0]]
  $region45: #{cond_rnn_lstm_embed_forward.1} parent=0
    _
  %s5 = ssub.s32 1, %s3
  %s6 = scalar_select 0, %s5, %s3
  loop: start=0, step=1, limit=4
  $region2: #{cond_rnn_lstm_embed_forward.1} parent=0 // loop_pre_header
    _
  $region3: #{cond_rnn_lstm_embed_forward.1} parent=0 // loop_header
    %s8 = sphi 0, %s12
    %p9 = scmp.ge.s32.totalorder %s8, 4
    %s15 = sphi 0, %s27
    %s16 = sphi 0, %s23
    %s17 = sphi 0, %s15
    %s18 = sphi 0, %s16
    %s19 = sphi 0, %s17
    %s20 = sphi 0, %s18
    %s32 = sphi 0, %s34
    %s35 = sphi 0, %s32
    %s36 = sphi 0, %s35
    %s52 = sphi 0, %s36
    %s56 = sphi 0, %s56
    %s58 = sphi 0, %s56
    %s59 = sphi 0, %s58
    %s73 = sphi 0, %s59
    %s81 = sphi 0, %s83
    %s84 = sphi 0, %s81
    %s85 = sphi 0, %s84
    %s101 = sphi 0, %s85
  $region4: #{cond_rnn_lstm_embed_forward.1} parent=0 // loop_header_branch
    %11 = sbr.rel (%p9) target = $region8
  $region5: #{cond_rnn_lstm_embed_forward.1} parent=0 // loop_body
    %s13 = ssub.s32 %s8, 1
    %s14 = ssub.s32 %s8, 2
    %s21 = sadd.s32 1, %s16
    %p22 = scmp.ge.s32.totalorder %s21, 1
    %s23 = scalar_select %p22, 0, %s21
    %s24 = sadd.s32 1, %s15
    %s25 = scalar_select %p22, %s24, %s15
    %p26 = scmp.ge.s32.totalorder %s25, 2
    %s27 = scalar_select %p26, 0, %s25
    %s28 = ssub.s32 %s15, %s27
    %s29 = ssub.s32 %s16, %s23
    %s30 = sor.u32 %s28, %s29
    %p31 = scmp.eq.s32.totalorder %s30, 0
    %s33 = sadd.s32 %s32, 1
    %s34 = scalar_select %p31, %s32, %s33
    %p37 = pneg %p31
    %p38 = scmp.eq.s32.totalorder %s8, 1
    %p39 = por %p37, %p38
    %p40 = scmp.ne.s32.totalorder %s32, %s35
    %p41 = scmp.eq.s32.totalorder %s8, 0
    %p42 = por %p40, %p41
    %p43 = scmp.ne.s32.totalorder %s32, %s35
    %p44 = scmp.eq.s32.totalorder %s13, 1
    %p45 = por %p43, %p44
    %p46 = scmp.ne.s32.totalorder %s35, %s36
    %p47 = scmp.eq.s32.totalorder %s13, 0
    %p48 = por %p46, %p47
    %p49 = scmp.ne.s32.totalorder %s35, %s36
    %p50 = scmp.eq.s32.totalorder %s14, 1
    %p51 = por %p49, %p50
    %p53 = scmp.ne.s32.totalorder %s36, %s52
    %p54 = scmp.eq.s32.totalorder %s14, 0
    %p55 = por %p53, %p54
    %s57 = sadd.s32 %s56, 1
    %p60 = scmp.eq.s32.totalorder %s8, 1
    %p61 = scmp.ne.s32.totalorder %s56, %s58
    %p62 = scmp.eq.s32.totalorder %s8, 0
    %p63 = por %p61, %p62
    %p64 = scmp.ne.s32.totalorder %s56, %s58
    %p65 = scmp.eq.s32.totalorder %s13, 1
    %p66 = por %p64, %p65
    %p67 = scmp.ne.s32.totalorder %s58, %s59
    %p68 = scmp.eq.s32.totalorder %s13, 0
    %p69 = por %p67, %p68
    %p70 = scmp.ne.s32.totalorder %s58, %s59
    %p71 = scmp.eq.s32.totalorder %s14, 1
    %p72 = por %p70, %p71
    %p74 = scmp.ne.s32.totalorder %s59, %s73
    %p75 = scmp.eq.s32.totalorder %s14, 0
    %p76 = por %p74, %p75
    %s77 = ssub.s32 %s15, %s27
    %s78 = ssub.s32 %s16, %s23
    %s79 = sor.u32 %s77, %s78
    %p80 = scmp.eq.s32.totalorder %s79, 0
    %s82 = sadd.s32 %s81, 1
    %s83 = scalar_select %p80, %s81, %s82
    %p86 = pneg %p80
    %p87 = scmp.eq.s32.totalorder %s8, 1
    %p88 = por %p86, %p87
    %p89 = scmp.ne.s32.totalorder %s81, %s84
    %p90 = scmp.eq.s32.totalorder %s8, 0
    %p91 = por %p89, %p90
    %p92 = scmp.ne.s32.totalorder %s81, %s84
    %p93 = scmp.eq.s32.totalorder %s13, 1
    %p94 = por %p92, %p93
    %p95 = scmp.ne.s32.totalorder %s84, %s85
    %p96 = scmp.eq.s32.totalorder %s13, 0
    %p97 = por %p95, %p96
    %p98 = scmp.ne.s32.totalorder %s84, %s85
    %p99 = scmp.eq.s32.totalorder %s14, 1
    %p100 = por %p98, %p99
    %p102 = scmp.ne.s32.totalorder %s85, %s101
    %p103 = scmp.eq.s32.totalorder %s14, 0
    %p104 = por %p102, %p103
    %p105 = scmp.le.s32.totalorder 1, %s8
    %p106 = scmp.lt.s32.totalorder %s8, 3
    %p107 = pnand %p105, %p106
    %p108 = pneg %p107
    // Predicated region
    $region9: #{cond_rnn_lstm_embed_forward.1} parent=5 // pred_check
      _
    $region10: #{cond_rnn_lstm_embed_forward.1} parent=5 // pred_check_branch
      %110 = sbr.rel (%p107) target = $region12
    $region11: #{cond_rnn_lstm_embed_forward.1} parent=5 // pred_region
      %s111 = ssub.s32 %s8, 1
      // Predicated region
      $region13: #{cond_rnn_lstm_embed_forward.1} parent=11 // pred_check
        %p112 = pneg %p69
      $region14: #{cond_rnn_lstm_embed_forward.1} parent=11 // pred_check_branch
        %114 = sbr.rel (%p112) target = $region16
      $region15: #{cond_rnn_lstm_embed_forward.1} parent=11 // pred_region
        _
      $region16: #{cond_rnn_lstm_embed_forward.1} parent=11 // pred_fallthru
        _
    $region12: #{cond_rnn_lstm_embed_forward.1} parent=5 // pred_fallthru
      _
    %p115 = scmp.lt.s32.totalorder %s8, 2
    // Predicated region
    $region17: #{cond_rnn_lstm_embed_forward.1} parent=5 // pred_check
      %p116 = pneg %p115
    $region18: #{cond_rnn_lstm_embed_forward.1} parent=5 // pred_check_branch
      %118 = sbr.rel (%p116) target = $region20
    $region19: #{cond_rnn_lstm_embed_forward.1} parent=5 // pred_region
      // Predicated region
      $region21: #{cond_rnn_lstm_embed_forward.1} parent=19 // pred_check
        %p119 = pneg %p42
      $region22: #{cond_rnn_lstm_embed_forward.1} parent=19 // pred_check_branch
        %121 = sbr.rel (%p119) target = $region24
      $region23: #{cond_rnn_lstm_embed_forward.1} parent=19 // pred_region
        %p122 = scmp.lt.s32.totalorder %s15, 1
        %s123 = scalar_select %p122, %s15, 1
        %p124 = scmp.lt.s32.totalorder %s16, 0
        %s125 = scalar_select %p124, %s16, 0
        %s126 = sadd.s32 %s125, %s123
        %s127 = smul.addr %s126, 8
        %s128 = scalar_lea.vmem %s0, %s127
      $region24: #{cond_rnn_lstm_embed_forward.1} parent=19 // pred_fallthru
        _
    $region20: #{cond_rnn_lstm_embed_forward.1} parent=5 // pred_fallthru
      _
    %p129 = scmp.le.s32.totalorder 1, %s8
    %p130 = scmp.lt.s32.totalorder %s8, 3
    %p131 = pnand %p129, %p130
    %p132 = pneg %p131
    // Predicated region
    $region25: #{cond_rnn_lstm_embed_forward.1} parent=5 // pred_check
      _
    $region26: #{cond_rnn_lstm_embed_forward.1} parent=5 // pred_check_branch
      %134 = sbr.rel (%p131) target = $region28
    $region27: #{cond_rnn_lstm_embed_forward.1} parent=5 // pred_region
      %s135 = ssub.s32 %s8, 1
      %p136 = scmp.lt.s32.totalorder %s17, 1
      %s137 = scalar_select %p136, %s17, 1
      %p138 = scmp.lt.s32.totalorder %s18, 0
      %s139 = scalar_select %p138, %s18, 0
      %s140 = sadd.s32 %s139, %s137
      %s141 = smul.addr %s140, 8
      %s142 = scalar_lea.vmem %s0, %s141
      %p143 = pneg %p48
      %p144 = pneg %p45
      %p145 = pneg %p69
      %p146 = pneg %p66
      %p147 = pneg %p97
      %p148 = pneg %p94
      %p149 = scmp.lt.s32.totalorder %s17, 1
      %s150 = scalar_select %p149, %s17, 1
      %p151 = scmp.lt.s32.totalorder %s18, 0
      %s152 = scalar_select %p151, %s18, 0
      %s153 = sadd.s32 %s152, %s150
      %s154 = smul.addr %s153, 8
      %s155 = scalar_lea.vmem %s2, %s154
      %p156 = scmp.lt.s32.totalorder %s17, 1
      %s157 = scalar_select %p156, %s17, 1
      %p158 = scmp.lt.s32.totalorder %s18, 0
      %s159 = scalar_select %p158, %s18, 0
      %s160 = sadd.s32 %s159, %s157
      %s161 = smul.addr %s160, 8
      %s162 = scalar_lea.vmem %s0, %s161
      %p163 = scmp.lt.s32.totalorder %s17, 1
      %s164 = scalar_select %p163, %s17, 1
      %p165 = scmp.lt.s32.totalorder %s18, 0
      %s166 = scalar_select %p165, %s18, 0
      %s167 = sadd.s32 %s166, %s164
      %s168 = smul.addr %s167, 8
      %s169 = scalar_lea.vmem %s2, %s168
      %p171 = scmp.eq.s32.totalorder %s18, 0
      // Predicated region
      $region29: #{cond_rnn_lstm_embed_forward.1} parent=27 // pred_check
        %p172 = pneg %p171
      $region30: #{cond_rnn_lstm_embed_forward.1} parent=27 // pred_check_branch
        %174 = sbr.rel (%p172) target = $region32
      $region31: #{cond_rnn_lstm_embed_forward.1} parent=27 // pred_region
        %vm175 = vcmask 253952
        %176 = vst.msk [vmem:[#allocation2] sm:$0x1] %vm175, 0.0
        %177 = vst.msk [vmem:[#allocation3] sm:$0x1] %vm175, 0.0
      $region32: #{cond_rnn_lstm_embed_forward.1} parent=27 // pred_fallthru
        _
      %v178 = vld [vmem:[%s1] sm:$0xf]
      %v179 = vld [vmem:[%s1 + $0x4] sm:$0xf]
      %v180 = vld [vmem:[%s1 + $0x8] sm:$0xf]
      %v181 = vld [vmem:[%s1 + $0xc] sm:$0xf]
      %v182 = vld [vmem:[%s162] sm:$0xff]
      %v183 = vld [vmem:[#allocation2] sm:$0x1]
      %v184 = vld [vmem:[#allocation3] sm:$0x1]
      %v185 = vpack.c.bf16 %v183, %v183
      %v190 = vunpack.c.l.b16 %v178
      %v191 = vunpack.c.l.b16 %v179
      %v192 = vunpack.c.l.b16 %v180
      %v193 = vunpack.c.l.b16 %v181
      %v194 = vpack.c.b16 %v191, %v190
      %v195 = vpack.c.b16 %v193, %v192
      %vm198 = vcmask 261120
      %v200 = vsel %vm198, %v185, 0
      %202 = vmatprep.subr.bf16.mxu0 0
      %203 = vmatpush1.bf16.msra.mxu0 %v194
      %204 = vmatprep.subr.bf16.mxu0 0
      %205 = vmatpush1.bf16.msra.mxu0 %v195
      %206 = vmatprep.subr.bf16.mxu0 0
      %207 = vmatpush1.bf16.msra.mxu0 0
      %208 = vmatprep.subr.bf16.mxu0 0
      %209 = vmatpush1.bf16.msra.mxu0 0
      %210 = vmatprep.subr.bf16.mxu0 0
      %211 = vmatpush1.bf16.msra.mxu0 0
      %212 = vmatprep.subr.bf16.mxu0 0
      %213 = vmatpush1.bf16.msra.mxu0 0
      %214 = vmatprep.subr.bf16.mxu0 0
      %215 = vmatpush1.bf16.msra.mxu0 0
      %216 = vmatprep.subr.bf16.mxu0 0
      %217 = vmatpush1.bf16.msra.mxu0 0
      %218 = vmatprep.subr.bf16.mxu0 0
      %219 = vmatpush1.bf16.msra.mxu0 0
      %220 = vmatprep.subr.bf16.mxu0 0
      %221 = vmatpush1.bf16.msra.mxu0 0
      %222 = vmatprep.subr.bf16.mxu0 0
      %223 = vmatpush1.bf16.msra.mxu0 0
      %224 = vmatprep.subr.bf16.mxu0 0
      %225 = vmatpush1.bf16.msra.mxu0 0
      %226 = vmatprep.subr.bf16.mxu0 0
      %227 = vmatpush1.bf16.msra.mxu0 0
      %228 = vmatprep.subr.bf16.mxu0 0
      %229 = vmatpush1.bf16.msra.mxu0 0
      %230 = vmatprep.subr.bf16.mxu0 0
      %231 = vmatpush1.bf16.msra.mxu0 0
      %232 = vmatprep.subr.bf16.mxu0 0
      %233 = vmatpush1.bf16.msra.mxu0 0
      %234 = vmatprep.mubr.bf16.mxu0 0
      %235 = vmatmul.mubr.bf16.gmra.mrb[0].mxu0 %v200
      %v236 = vpop.f32.mrb[0].mxu0
      %v237 = vadd.f32 0.0, %v236
      %v238 = vpop.f32.mrb[0].mxu0
      %v239 = vpop.f32.mrb[0].mxu0
      %v240 = vpop.f32.mrb[0].mxu0
      %241 = vdwg.mxu0
      %v242 = vadd.f32 %v182, %v237
      %v243 = vxor.u32 %v242, 2147483648
      %v244 = vmul.f32 %v243, 1.442695
      %v245 = vpow.pop %v244
      %v246 = vadd.f32 %v245, 1.0
      %v247 = vrcp.pop %v246
      %v248 = vmul.f32 1.0, %v247
      %v249 = vtanh.pop %v242
      %v251 = vlaneseq
      %v252 = vshrl.u32 %v251, 7
      %v253 = vsub.s32 0, %v252
      %v254 = vrot.slane %v184, %v253
      %255 = vrot.lane.b32.xlu0 %v254, 32
      %v256 = vpop.permute.xlu0 %255
      %v258 = vmul.f32 %v248, %v256
      %260 = vrot.lane.b32.xlu0 %v249, 64
      %v261 = vpop.permute.xlu0 %260
      %v263 = vmul.f32 %v248, %v261
      %265 = vrot.lane.b32.xlu0 %v263, 32
      %v266 = vpop.permute.xlu0 %265
      %v268 = vadd.f32 %v258, %v266
      %v269 = vtanh.pop %v268
      %271 = vrot.lane.b32.xlu0 %v269, 64
      %v272 = vpop.permute.xlu0 %271
      %v274 = vmul.f32 %v248, %v272
      %276 = vrot.lane.b32.xlu0 %v274, 32
      %v277 = vpop.permute.xlu0 %276
      %vm279 = vcmask 253952
      %280 = vst.msk [vmem:[%s169] sm:$0x1] %vm279, %v277
      %v281 = vpack.c.bf16 %v274, %v274
      %283 = vrot.lane.b32.xlu0 %v281, 32
      %v284 = vpop.permute.xlu0 %283
      %v286 = vsel %vm198, %v284, 0
      %288 = vmatprep.subr.bf16.mxu0 0
      %289 = vmatpush1.bf16.msra.mxu0 %v194
      %290 = vmatprep.subr.bf16.mxu0 0
      %291 = vmatpush1.bf16.msra.mxu0 %v195
      %292 = vmatprep.subr.bf16.mxu0 0
      %293 = vmatpush1.bf16.msra.mxu0 0
      %294 = vmatprep.subr.bf16.mxu0 0
      %295 = vmatpush1.bf16.msra.mxu0 0
      %296 = vmatprep.subr.bf16.mxu0 0
      %297 = vmatpush1.bf16.msra.mxu0 0
      %298 = vmatprep.subr.bf16.mxu0 0
      %299 = vmatpush1.bf16.msra.mxu0 0
      %300 = vmatprep.subr.bf16.mxu0 0
      %301 = vmatpush1.bf16.msra.mxu0 0
      %302 = vmatprep.subr.bf16.mxu0 0
      %303 = vmatpush1.bf16.msra.mxu0 0
      %304 = vmatprep.subr.bf16.mxu0 0
      %305 = vmatpush1.bf16.msra.mxu0 0
      %306 = vmatprep.subr.bf16.mxu0 0
      %307 = vmatpush1.bf16.msra.mxu0 0
      %308 = vmatprep.subr.bf16.mxu0 0
      %309 = vmatpush1.bf16.msra.mxu0 0
      %310 = vmatprep.subr.bf16.mxu0 0
      %311 = vmatpush1.bf16.msra.mxu0 0
      %312 = vmatprep.subr.bf16.mxu0 0
      %313 = vmatpush1.bf16.msra.mxu0 0
      %314 = vmatprep.subr.bf16.mxu0 0
      %315 = vmatpush1.bf16.msra.mxu0 0
      %316 = vmatprep.subr.bf16.mxu0 0
      %317 = vmatpush1.bf16.msra.mxu0 0
      %318 = vmatprep.subr.bf16.mxu0 0
      %319 = vmatpush1.bf16.msra.mxu0 0
      %320 = vmatprep.mubr.bf16.mxu0 0
      %321 = vmatmul.mubr.bf16.gmra.mrb[0].mxu0 %v286
      %v322 = vpop.f32.mrb[0].mxu0
      %v323 = vadd.f32 0.0, %v322
      %v324 = vpop.f32.mrb[0].mxu0
      %v325 = vpop.f32.mrb[0].mxu0
      %v326 = vpop.f32.mrb[0].mxu0
      %327 = vdwg.mxu0
      %v329 = vrot.slane %v323, 7
      %v331 = vadd.f32 %v182, %v329
      %v332 = vxor.u32 %v331, 2147483648
      %v333 = vmul.f32 %v332, 1.442695
      %v334 = vpow.pop %v333
      %v335 = vadd.f32 %v334, 1.0
      %v336 = vrcp.pop %v335
      %v337 = vmul.f32 1.0, %v336
      %v338 = vtanh.pop %v331
      %v340 = vrot.slane %v268, 7
      %v342 = vmul.f32 %v337, %v340
      %344 = vrot.lane.b32.xlu0 %v338, 64
      %v345 = vpop.permute.xlu0 %344
      %v347 = vmul.f32 %v337, %v345
      %349 = vrot.lane.b32.xlu0 %v347, 32
      %v350 = vpop.permute.xlu0 %349
      %v352 = vadd.f32 %v342, %v350
      %v353 = vtanh.pop %v352
      %355 = vrot.lane.b32.xlu0 %v353, 64
      %v356 = vpop.permute.xlu0 %355
      %v358 = vmul.f32 %v337, %v356
      %360 = vrot.lane.b32.xlu0 %v358, 32
      %v361 = vpop.permute.xlu0 %360
      %vm363 = vcmask 254977
      %364 = vst.msk [vmem:[%s169] sm:$0x2] %vm363, %v361
      %v365 = vpack.c.bf16 %v358, %v358
      %v367 = vshrl.u32 %v365, 16
      %369 = vrot.lane.b32.xlu0 %v367, 32
      %v370 = vpop.permute.xlu0 %369
      %v372 = vsel %vm198, %v370, 0
      %374 = vmatprep.subr.bf16.mxu0 0
      %375 = vmatpush1.bf16.msra.mxu0 %v194
      %376 = vmatprep.subr.bf16.mxu0 0
      %377 = vmatpush1.bf16.msra.mxu0 %v195
      %378 = vmatprep.subr.bf16.mxu0 0
      %379 = vmatpush1.bf16.msra.mxu0 0
      %380 = vmatprep.subr.bf16.mxu0 0
      %381 = vmatpush1.bf16.msra.mxu0 0
      %382 = vmatprep.subr.bf16.mxu0 0
      %383 = vmatpush1.bf16.msra.mxu0 0
      %384 = vmatprep.subr.bf16.mxu0 0
      %385 = vmatpush1.bf16.msra.mxu0 0
      %386 = vmatprep.subr.bf16.mxu0 0
      %387 = vmatpush1.bf16.msra.mxu0 0
      %388 = vmatprep.subr.bf16.mxu0 0
      %389 = vmatpush1.bf16.msra.mxu0 0
      %390 = vmatprep.subr.bf16.mxu0 0
      %391 = vmatpush1.bf16.msra.mxu0 0
      %392 = vmatprep.subr.bf16.mxu0 0
      %393 = vmatpush1.bf16.msra.mxu0 0
      %394 = vmatprep.subr.bf16.mxu0 0
      %395 = vmatpush1.bf16.msra.mxu0 0
      %396 = vmatprep.subr.bf16.mxu0 0
      %397 = vmatpush1.bf16.msra.mxu0 0
      %398 = vmatprep.subr.bf16.mxu0 0
      %399 = vmatpush1.bf16.msra.mxu0 0
      %400 = vmatprep.subr.bf16.mxu0 0
      %401 = vmatpush1.bf16.msra.mxu0 0
      %402 = vmatprep.subr.bf16.mxu0 0
      %403 = vmatpush1.bf16.msra.mxu0 0
      %404 = vmatprep.subr.bf16.mxu0 0
      %405 = vmatpush1.bf16.msra.mxu0 0
      %406 = vmatprep.mubr.bf16.mxu0 0
      %407 = vmatmul.mubr.bf16.gmra.mrb[0].mxu0 %v372
      %v408 = vpop.f32.mrb[0].mxu0
      %v409 = vadd.f32 0.0, %v408
      %v410 = vpop.f32.mrb[0].mxu0
      %v411 = vpop.f32.mrb[0].mxu0
      %v412 = vpop.f32.mrb[0].mxu0
      %413 = vdwg.mxu0
      %v415 = vrot.slane %v409, 6
      %v417 = vadd.f32 %v182, %v415
      %v418 = vxor.u32 %v417, 2147483648
      %v419 = vmul.f32 %v418, 1.442695
      %v420 = vpow.pop %v419
      %v421 = vadd.f32 %v420, 1.0
      %v422 = vrcp.pop %v421
      %v423 = vmul.f32 1.0, %v422
      %v424 = vtanh.pop %v417
      %v426 = vrot.slane %v352, 7
      %v428 = vmul.f32 %v423, %v426
      %430 = vrot.lane.b32.xlu0 %v424, 64
      %v431 = vpop.permute.xlu0 %430
      %v433 = vmul.f32 %v423, %v431
      %435 = vrot.lane.b32.xlu0 %v433, 32
      %v436 = vpop.permute.xlu0 %435
      %v438 = vadd.f32 %v428, %v436
      %v439 = vtanh.pop %v438
      %441 = vrot.lane.b32.xlu0 %v439, 64
      %v442 = vpop.permute.xlu0 %441
      %v444 = vmul.f32 %v423, %v442
      %446 = vrot.lane.b32.xlu0 %v444, 32
      %v447 = vpop.permute.xlu0 %446
      %vm449 = vcmask 256002
      %450 = vst.msk [vmem:[%s169] sm:$0x4] %vm449, %v447
      %v451 = vpack.c.bf16 %v444, %v444
      %v453 = vrot.slane %v451, 1
      %454 = vrot.lane.b32.xlu0 %v453, 32
      %v455 = vpop.permute.xlu0 %454
      %v457 = vsel %vm198, %v455, 0
      %459 = vmatprep.subr.bf16.mxu0 0
      %460 = vmatpush1.bf16.msra.mxu0 %v194
      %461 = vmatprep.subr.bf16.mxu0 0
      %462 = vmatpush1.bf16.msra.mxu0 %v195
      %463 = vmatprep.subr.bf16.mxu0 0
      %464 = vmatpush1.bf16.msra.mxu0 0
      %465 = vmatprep.subr.bf16.mxu0 0
      %466 = vmatpush1.bf16.msra.mxu0 0
      %467 = vmatprep.subr.bf16.mxu0 0
      %468 = vmatpush1.bf16.msra.mxu0 0
      %469 = vmatprep.subr.bf16.mxu0 0
      %470 = vmatpush1.bf16.msra.mxu0 0
      %471 = vmatprep.subr.bf16.mxu0 0
      %472 = vmatpush1.bf16.msra.mxu0 0
      %473 = vmatprep.subr.bf16.mxu0 0
      %474 = vmatpush1.bf16.msra.mxu0 0
      %475 = vmatprep.subr.bf16.mxu0 0
      %476 = vmatpush1.bf16.msra.mxu0 0
      %477 = vmatprep.subr.bf16.mxu0 0
      %478 = vmatpush1.bf16.msra.mxu0 0
      %479 = vmatprep.subr.bf16.mxu0 0
      %480 = vmatpush1.bf16.msra.mxu0 0
      %481 = vmatprep.subr.bf16.mxu0 0
      %482 = vmatpush1.bf16.msra.mxu0 0
      %483 = vmatprep.subr.bf16.mxu0 0
      %484 = vmatpush1.bf16.msra.mxu0 0
      %485 = vmatprep.subr.bf16.mxu0 0
      %486 = vmatpush1.bf16.msra.mxu0 0
      %487 = vmatprep.subr.bf16.mxu0 0
      %488 = vmatpush1.bf16.msra.mxu0 0
      %489 = vmatprep.subr.bf16.mxu0 0
      %490 = vmatpush1.bf16.msra.mxu0 0
      %491 = vmatprep.mubr.bf16.mxu0 0
      %492 = vmatmul.mubr.bf16.gmra.mrb[0].mxu0 %v457
      %v493 = vpop.f32.mrb[0].mxu0
      %v494 = vadd.f32 0.0, %v493
      %v495 = vpop.f32.mrb[0].mxu0
      %v496 = vpop.f32.mrb[0].mxu0
      %v497 = vpop.f32.mrb[0].mxu0
      %498 = vdwg.mxu0
      %v500 = vrot.slane %v494, 5
      %v502 = vadd.f32 %v182, %v500
      %v503 = vxor.u32 %v502, 2147483648
      %v504 = vmul.f32 %v503, 1.442695
      %v505 = vpow.pop %v504
      %v506 = vadd.f32 %v505, 1.0
      %v507 = vrcp.pop %v506
      %v508 = vmul.f32 1.0, %v507
      %v509 = vtanh.pop %v502
      %v511 = vrot.slane %v438, 7
      %v513 = vmul.f32 %v508, %v511
      %515 = vrot.lane.b32.xlu0 %v509, 64
      %v516 = vpop.permute.xlu0 %515
      %v518 = vmul.f32 %v508, %v516
      %520 = vrot.lane.b32.xlu0 %v518, 32
      %v521 = vpop.permute.xlu0 %520
      %v523 = vadd.f32 %v513, %v521
      %v524 = vtanh.pop %v523
      %526 = vrot.lane.b32.xlu0 %v524, 64
      %v527 = vpop.permute.xlu0 %526
      %v529 = vmul.f32 %v508, %v527
      %531 = vrot.lane.b32.xlu0 %v529, 32
      %v532 = vpop.permute.xlu0 %531
      %vm534 = vcmask 257027
      %535 = vst.msk [vmem:[%s169] sm:$0x8] %vm534, %v532
      %v536 = vpack.c.bf16 %v529, %v529
      %v538 = vshrl.u32 %v536, 16
      %v540 = vrot.slane %v538, 1
      %541 = vrot.lane.b32.xlu0 %v540, 32
      %v542 = vpop.permute.xlu0 %541
      %v544 = vsel %vm198, %v542, 0
      %546 = vmatprep.subr.bf16.mxu0 0
      %547 = vmatpush1.bf16.msra.mxu0 %v194
      %548 = vmatprep.subr.bf16.mxu0 0
      %549 = vmatpush1.bf16.msra.mxu0 %v195
      %550 = vmatprep.subr.bf16.mxu0 0
      %551 = vmatpush1.bf16.msra.mxu0 0
      %552 = vmatprep.subr.bf16.mxu0 0
      %553 = vmatpush1.bf16.msra.mxu0 0
      %554 = vmatprep.subr.bf16.mxu0 0
      %555 = vmatpush1.bf16.msra.mxu0 0
      %556 = vmatprep.subr.bf16.mxu0 0
      %557 = vmatpush1.bf16.msra.mxu0 0
      %558 = vmatprep.subr.bf16.mxu0 0
      %559 = vmatpush1.bf16.msra.mxu0 0
      %560 = vmatprep.subr.bf16.mxu0 0
      %561 = vmatpush1.bf16.msra.mxu0 0
      %562 = vmatprep.subr.bf16.mxu0 0
      %563 = vmatpush1.bf16.msra.mxu0 0
      %564 = vmatprep.subr.bf16.mxu0 0
      %565 = vmatpush1.bf16.msra.mxu0 0
      %566 = vmatprep.subr.bf16.mxu0 0
      %567 = vmatpush1.bf16.msra.mxu0 0
      %568 = vmatprep.subr.bf16.mxu0 0
      %569 = vmatpush1.bf16.msra.mxu0 0
      %570 = vmatprep.subr.bf16.mxu0 0
      %571 = vmatpush1.bf16.msra.mxu0 0
      %572 = vmatprep.subr.bf16.mxu0 0
      %573 = vmatpush1.bf16.msra.mxu0 0
      %574 = vmatprep.subr.bf16.mxu0 0
      %575 = vmatpush1.bf16.msra.mxu0 0
      %576 = vmatprep.subr.bf16.mxu0 0
      %577 = vmatpush1.bf16.msra.mxu0 0
      %578 = vmatprep.mubr.bf16.mxu0 0
      %579 = vmatmul.mubr.bf16.gmra.mrb[0].mxu0 %v544
      %v580 = vpop.f32.mrb[0].mxu0
      %v581 = vadd.f32 0.0, %v580
      %v582 = vpop.f32.mrb[0].mxu0
      %v583 = vpop.f32.mrb[0].mxu0
      %v584 = vpop.f32.mrb[0].mxu0
      %585 = vdwg.mxu0
      %v587 = vrot.slane %v581, 4
      %v589 = vadd.f32 %v182, %v587
      %v590 = vxor.u32 %v589, 2147483648
      %v591 = vmul.f32 %v590, 1.442695
      %v592 = vpow.pop %v591
      %v593 = vadd.f32 %v592, 1.0
      %v594 = vrcp.pop %v593
      %v595 = vmul.f32 1.0, %v594
      %v596 = vtanh.pop %v589
      %v598 = vrot.slane %v523, 7
      %v600 = vmul.f32 %v595, %v598
      %602 = vrot.lane.b32.xlu0 %v596, 64
      %v603 = vpop.permute.xlu0 %602
      %v605 = vmul.f32 %v595, %v603
      %607 = vrot.lane.b32.xlu0 %v605, 32
      %v608 = vpop.permute.xlu0 %607
      %v610 = vadd.f32 %v600, %v608
      %v611 = vtanh.pop %v610
      %613 = vrot.lane.b32.xlu0 %v611, 64
      %v614 = vpop.permute.xlu0 %613
      %v616 = vmul.f32 %v595, %v614
      %618 = vrot.lane.b32.xlu0 %v616, 32
      %v619 = vpop.permute.xlu0 %618
      %vm621 = vcmask 258052
      %622 = vst.msk [vmem:[%s169] sm:$0x10] %vm621, %v619
      %v623 = vpack.c.bf16 %v616, %v616
      %v625 = vrot.slane %v623, 2
      %626 = vrot.lane.b32.xlu0 %v625, 32
      %v627 = vpop.permute.xlu0 %626
      %v629 = vsel %vm198, %v627, 0
      %631 = vmatprep.subr.bf16.mxu0 0
      %632 = vmatpush1.bf16.msra.mxu0 %v194
      %633 = vmatprep.subr.bf16.mxu0 0
      %634 = vmatpush1.bf16.msra.mxu0 %v195
      %635 = vmatprep.subr.bf16.mxu0 0
      %636 = vmatpush1.bf16.msra.mxu0 0
      %637 = vmatprep.subr.bf16.mxu0 0
      %638 = vmatpush1.bf16.msra.mxu0 0
      %639 = vmatprep.subr.bf16.mxu0 0
      %640 = vmatpush1.bf16.msra.mxu0 0
      %641 = vmatprep.subr.bf16.mxu0 0
      %642 = vmatpush1.bf16.msra.mxu0 0
      %643 = vmatprep.subr.bf16.mxu0 0
      %644 = vmatpush1.bf16.msra.mxu0 0
      %645 = vmatprep.subr.bf16.mxu0 0
      %646 = vmatpush1.bf16.msra.mxu0 0
      %647 = vmatprep.subr.bf16.mxu0 0
      %648 = vmatpush1.bf16.msra.mxu0 0
      %649 = vmatprep.subr.bf16.mxu0 0
      %650 = vmatpush1.bf16.msra.mxu0 0
      %651 = vmatprep.subr.bf16.mxu0 0
      %652 = vmatpush1.bf16.msra.mxu0 0
      %653 = vmatprep.subr.bf16.mxu0 0
      %654 = vmatpush1.bf16.msra.mxu0 0
      %655 = vmatprep.subr.bf16.mxu0 0
      %656 = vmatpush1.bf16.msra.mxu0 0
      %657 = vmatprep.subr.bf16.mxu0 0
      %658 = vmatpush1.bf16.msra.mxu0 0
      %659 = vmatprep.subr.bf16.mxu0 0
      %660 = vmatpush1.bf16.msra.mxu0 0
      %661 = vmatprep.subr.bf16.mxu0 0
      %662 = vmatpush1.bf16.msra.mxu0 0
      %663 = vmatprep.mubr.bf16.mxu0 0
      %664 = vmatmul.mubr.bf16.gmra.mrb[0].mxu0 %v629
      %v665 = vpop.f32.mrb[0].mxu0
      %v666 = vadd.f32 0.0, %v665
      %v667 = vpop.f32.mrb[0].mxu0
      %v668 = vpop.f32.mrb[0].mxu0
      %v669 = vpop.f32.mrb[0].mxu0
      %670 = vdwg.mxu0
      %v672 = vrot.slane %v666, 3
      %v674 = vadd.f32 %v182, %v672
      %v675 = vxor.u32 %v674, 2147483648
      %v676 = vmul.f32 %v675, 1.442695
      %v677 = vpow.pop %v676
      %v678 = vadd.f32 %v677, 1.0
      %v679 = vrcp.pop %v678
      %v680 = vmul.f32 1.0, %v679
      %v681 = vtanh.pop %v674
      %v683 = vrot.slane %v610, 7
      %v685 = vmul.f32 %v680, %v683
      %687 = vrot.lane.b32.xlu0 %v681, 64
      %v688 = vpop.permute.xlu0 %687
      %v690 = vmul.f32 %v680, %v688
      %692 = vrot.lane.b32.xlu0 %v690, 32
      %v693 = vpop.permute.xlu0 %692
      %v695 = vadd.f32 %v685, %v693
      %v696 = vtanh.pop %v695
      %698 = vrot.lane.b32.xlu0 %v696, 64
      %v699 = vpop.permute.xlu0 %698
      %v701 = vmul.f32 %v680, %v699
      %703 = vrot.lane.b32.xlu0 %v701, 32
      %v704 = vpop.permute.xlu0 %703
      %vm706 = vcmask 259077
      %707 = vst.msk [vmem:[%s169] sm:$0x20] %vm706, %v704
      %v708 = vpack.c.bf16 %v701, %v701
      %v710 = vshrl.u32 %v708, 16
      %v712 = vrot.slane %v710, 2
      %713 = vrot.lane.b32.xlu0 %v712, 32
      %v714 = vpop.permute.xlu0 %713
      %v716 = vsel %vm198, %v714, 0
      %718 = vmatprep.subr.bf16.mxu0 0
      %719 = vmatpush1.bf16.msra.mxu0 %v194
      %720 = vmatprep.subr.bf16.mxu0 0
      %721 = vmatpush1.bf16.msra.mxu0 %v195
      %722 = vmatprep.subr.bf16.mxu0 0
      %723 = vmatpush1.bf16.msra.mxu0 0
      %724 = vmatprep.subr.bf16.mxu0 0
      %725 = vmatpush1.bf16.msra.mxu0 0
      %726 = vmatprep.subr.bf16.mxu0 0
      %727 = vmatpush1.bf16.msra.mxu0 0
      %728 = vmatprep.subr.bf16.mxu0 0
      %729 = vmatpush1.bf16.msra.mxu0 0
      %730 = vmatprep.subr.bf16.mxu0 0
      %731 = vmatpush1.bf16.msra.mxu0 0
      %732 = vmatprep.subr.bf16.mxu0 0
      %733 = vmatpush1.bf16.msra.mxu0 0
      %734 = vmatprep.subr.bf16.mxu0 0
      %735 = vmatpush1.bf16.msra.mxu0 0
      %736 = vmatprep.subr.bf16.mxu0 0
      %737 = vmatpush1.bf16.msra.mxu0 0
      %738 = vmatprep.subr.bf16.mxu0 0
      %739 = vmatpush1.bf16.msra.mxu0 0
      %740 = vmatprep.subr.bf16.mxu0 0
      %741 = vmatpush1.bf16.msra.mxu0 0
      %742 = vmatprep.subr.bf16.mxu0 0
      %743 = vmatpush1.bf16.msra.mxu0 0
      %744 = vmatprep.subr.bf16.mxu0 0
      %745 = vmatpush1.bf16.msra.mxu0 0
      %746 = vmatprep.subr.bf16.mxu0 0
      %747 = vmatpush1.bf16.msra.mxu0 0
      %748 = vmatprep.subr.bf16.mxu0 0
      %749 = vmatpush1.bf16.msra.mxu0 0
      %750 = vmatprep.mubr.bf16.mxu0 0
      %751 = vmatmul.mubr.bf16.gmra.mrb[0].mxu0 %v716
      %v752 = vpop.f32.mrb[0].mxu0
      %v753 = vadd.f32 0.0, %v752
      %v754 = vpop.f32.mrb[0].mxu0
      %v755 = vpop.f32.mrb[0].mxu0
      %v756 = vpop.f32.mrb[0].mxu0
      %757 = vdwg.mxu0
      %v759 = vrot.slane %v753, 2
      %v761 = vadd.f32 %v182, %v759
      %v762 = vxor.u32 %v761, 2147483648
      %v763 = vmul.f32 %v762, 1.442695
      %v764 = vpow.pop %v763
      %v765 = vadd.f32 %v764, 1.0
      %v766 = vrcp.pop %v765
      %v767 = vmul.f32 1.0, %v766
      %v768 = vtanh.pop %v761
      %v770 = vrot.slane %v695, 7
      %v772 = vmul.f32 %v767, %v770
      %774 = vrot.lane.b32.xlu0 %v768, 64
      %v775 = vpop.permute.xlu0 %774
      %v777 = vmul.f32 %v767, %v775
      %779 = vrot.lane.b32.xlu0 %v777, 32
      %v780 = vpop.permute.xlu0 %779
      %v782 = vadd.f32 %v772, %v780
      %v783 = vtanh.pop %v782
      %785 = vrot.lane.b32.xlu0 %v783, 64
      %v786 = vpop.permute.xlu0 %785
      %v788 = vmul.f32 %v767, %v786
      %790 = vrot.lane.b32.xlu0 %v788, 32
      %v791 = vpop.permute.xlu0 %790
      %vm793 = vcmask 260102
      %794 = vst.msk [vmem:[%s169] sm:$0x40] %vm793, %v791
      %v795 = vpack.c.bf16 %v788, %v788
      %v797 = vrot.slane %v795, 3
      %798 = vrot.lane.b32.xlu0 %v797, 32
      %v799 = vpop.permute.xlu0 %798
      %v801 = vsel %vm198, %v799, 0
      %803 = vmatprep.subr.bf16.mxu0 0
      %804 = vmatpush1.bf16.msra.mxu0 %v194
      %805 = vmatprep.subr.bf16.mxu0 0
      %806 = vmatpush1.bf16.msra.mxu0 %v195
      %807 = vmatprep.subr.bf16.mxu0 0
      %808 = vmatpush1.bf16.msra.mxu0 0
      %809 = vmatprep.subr.bf16.mxu0 0
      %810 = vmatpush1.bf16.msra.mxu0 0
      %811 = vmatprep.subr.bf16.mxu0 0
      %812 = vmatpush1.bf16.msra.mxu0 0
      %813 = vmatprep.subr.bf16.mxu0 0
      %814 = vmatpush1.bf16.msra.mxu0 0
      %815 = vmatprep.subr.bf16.mxu0 0
      %816 = vmatpush1.bf16.msra.mxu0 0
      %817 = vmatprep.subr.bf16.mxu0 0
      %818 = vmatpush1.bf16.msra.mxu0 0
      %819 = vmatprep.subr.bf16.mxu0 0
      %820 = vmatpush1.bf16.msra.mxu0 0
      %821 = vmatprep.subr.bf16.mxu0 0
      %822 = vmatpush1.bf16.msra.mxu0 0
      %823 = vmatprep.subr.bf16.mxu0 0
      %824 = vmatpush1.bf16.msra.mxu0 0
      %825 = vmatprep.subr.bf16.mxu0 0
      %826 = vmatpush1.bf16.msra.mxu0 0
      %827 = vmatprep.subr.bf16.mxu0 0
      %828 = vmatpush1.bf16.msra.mxu0 0
      %829 = vmatprep.subr.bf16.mxu0 0
      %830 = vmatpush1.bf16.msra.mxu0 0
      %831 = vmatprep.subr.bf16.mxu0 0
      %832 = vmatpush1.bf16.msra.mxu0 0
      %833 = vmatprep.subr.bf16.mxu0 0
      %834 = vmatpush1.bf16.msra.mxu0 0
      %835 = vmatprep.mubr.bf16.mxu0 0
      %836 = vmatmul.mubr.bf16.gmra.mrb[0].mxu0 %v801
      %v837 = vpop.f32.mrb[0].mxu0
      %v838 = vadd.f32 0.0, %v837
      %v839 = vpop.f32.mrb[0].mxu0
      %v840 = vpop.f32.mrb[0].mxu0
      %v841 = vpop.f32.mrb[0].mxu0
      %842 = vdwg.mxu0
      %v844 = vrot.slane %v838, 1
      %v846 = vadd.f32 %v182, %v844
      %v847 = vxor.u32 %v846, 2147483648
      %v848 = vmul.f32 %v847, 1.442695
      %v849 = vpow.pop %v848
      %v850 = vadd.f32 %v849, 1.0
      %v851 = vrcp.pop %v850
      %v852 = vmul.f32 1.0, %v851
      %v853 = vtanh.pop %v846
      %v855 = vrot.slane %v782, 7
      %v857 = vmul.f32 %v852, %v855
      %859 = vrot.lane.b32.xlu0 %v853, 64
      %v860 = vpop.permute.xlu0 %859
      %v862 = vmul.f32 %v852, %v860
      %864 = vrot.lane.b32.xlu0 %v862, 32
      %v865 = vpop.permute.xlu0 %864
      %v867 = vadd.f32 %v857, %v865
      %v868 = vtanh.pop %v867
      %870 = vrot.lane.b32.xlu0 %v868, 64
      %v871 = vpop.permute.xlu0 %870
      %v873 = vmul.f32 %v852, %v871
      %875 = vrot.lane.b32.xlu0 %v873, 32
      %v876 = vpop.permute.xlu0 %875
      %vm878 = vcmask 261127
      %879 = vst.msk [vmem:[%s169] sm:$0x80] %vm878, %v876
      %880 = vst.msk [vmem:[#allocation2 - $0x7] sm:$0x80] %vm878, %v876
      %882 = vrot.lane.b32.xlu0 %v867, 96
      %v883 = vpop.permute.xlu0 %882
      %885 = vst.msk [vmem:[#allocation3 - $0x7] sm:$0x80] %vm878, %v883
      %p886 = scmp.lt.s32.totalorder %s17, 1
      %s887 = scalar_select %p886, %s17, 1
      %p888 = scmp.lt.s32.totalorder %s18, 0
      %s889 = scalar_select %p888, %s18, 0
      %s890 = sadd.s32 %s889, %s887
      %s891 = smul.addr %s890, 8
      %s892 = scalar_lea.vmem %s2, %s891
      // Predicated region
      $region33: #{cond_rnn_lstm_embed_forward.1} parent=27 // pred_check
        %p893 = pneg %p94
      $region34: #{cond_rnn_lstm_embed_forward.1} parent=27 // pred_check_branch
        %895 = sbr.rel (%p893) target = $region36
      $region35: #{cond_rnn_lstm_embed_forward.1} parent=27 // pred_region
        _
      $region36: #{cond_rnn_lstm_embed_forward.1} parent=27 // pred_fallthru
        _
    $region28: #{cond_rnn_lstm_embed_forward.1} parent=5 // pred_fallthru
      _
    %p896 = scmp.le.s32.totalorder 2, %s8
    // Predicated region
    $region37: #{cond_rnn_lstm_embed_forward.1} parent=5 // pred_check
      %p897 = pneg %p896
    $region38: #{cond_rnn_lstm_embed_forward.1} parent=5 // pred_check_branch
      %899 = sbr.rel (%p897) target = $region40
    $region39: #{cond_rnn_lstm_embed_forward.1} parent=5 // pred_region
      %s900 = ssub.s32 %s8, 2
      // Predicated region
      $region41: #{cond_rnn_lstm_embed_forward.1} parent=39 // pred_check
        %p901 = pneg %p100
      $region42: #{cond_rnn_lstm_embed_forward.1} parent=39 // pred_check_branch
        %903 = sbr.rel (%p901) target = $region44
      $region43: #{cond_rnn_lstm_embed_forward.1} parent=39 // pred_region
        %p904 = scmp.lt.s32.totalorder %s19, 1
        %s905 = scalar_select %p904, %s19, 1
        %p906 = scmp.lt.s32.totalorder %s20, 0
        %s907 = scalar_select %p906, %s20, 0
        %s908 = sadd.s32 %s907, %s905
        %s909 = smul.addr %s908, 8
        %s910 = scalar_lea.vmem %s2, %s909
      $region44: #{cond_rnn_lstm_embed_forward.1} parent=39 // pred_fallthru
        _
    $region40: #{cond_rnn_lstm_embed_forward.1} parent=5 // pred_fallthru
      _
  $region6: #{cond_rnn_lstm_embed_forward.1} parent=0 // loop_footer
    %s12 = sadd.s32 1, %s8
  $region7: #{cond_rnn_lstm_embed_forward.1} parent=0 // loop_footer_branch
    %7 = sbr.rel target = $region3
  $region8: #{cond_rnn_lstm_embed_forward.1} parent=0 // loop_exit
    _

</llo_original>
